<compile_context>
chip_gen: v7x
topology: tpu7x:2x2x1
jax: 0.10.0
libtpu: 0.0.40
codegen_flags: <defaults>
</compile_context>

<pallas_src>
import functools

import numpy as np
import jax
import jax.numpy as jnp
from jax.experimental import pallas as pl
from jax.experimental.pallas import tpu as pltpu

_LANE = 128
_M_ALIGN = 16      # bf16 vregs pack (16,128): keep M tiles sublane-dense
_MIN_TM = 256      # below this, chunk H instead of shrinking the M tile


def _round_up(x, m):
    return (x + m - 1) // m * m


def _detect_tpu():
    """(VMEM capacity bytes, TensorCores per chip); conservative fallback."""
    vmem_cap = 64 << 20      # v7x-conservative default if detection fails
    cores = 1
    try:
        info = pltpu.get_tpu_info()
        v = getattr(info, "vmem_capacity_bytes", None)
        if v:
            vmem_cap = int(v)
        for name in ("num_cores", "tensorcore_count", "num_tensorcores",
                     "cores_per_chip", "tensor_cores_per_chip"):
            c = getattr(info, name, None)
            if c:
                cores = int(c)
                break
    except Exception:
        pass
    return vmem_cap, cores


_VMEM_CAP, _NUM_CORES = _detect_tpu()
# Leave headroom for Mosaic internal scratch: ~48 MiB usable on v7x (64 MiB
# physical), ~102 MiB on v5e/v6e (128 MiB physical).
_VMEM_BUDGET = _VMEM_CAP - max(16 << 20, _VMEM_CAP // 5)


def _mlp_kernel(x_ref, w1_ref, b1_ref, w2_ref, b2_ref, o_ref, acc_ref):
    """Fused Linear -> ReLU -> (Dropout: identity at inference) -> Linear.

    Grid = (M tiles, H chunks).  The hidden dim is a reduction axis for the
    second matmul: partial products accumulate in an f32 VMEM scratch and the
    output tile is written once, on the last H chunk.
    """
    j = pl.program_id(1)

    @pl.when(j == 0)
    def _():
        acc_ref[...] = jnp.zeros_like(acc_ref)

    # Cast the activation tile to the MXU dtype in-kernel: the HBM read stays
    # in the caller's dtype and no separate XLA cast/pad pass over x is needed.
    x = x_ref[...].astype(w1_ref.dtype)
    # First linear (this H chunk): bf16 x bf16 on the MXU, f32 accumulation.
    h = jnp.dot(x, w1_ref[...], preferred_element_type=jnp.float32)
    # Bias + ReLU in f32 on the VPU (portable to v5e which has no bf16 VALU).
    h = jnp.maximum(h + b1_ref[...], 0.0)
    # TODO(synk): training-mode dropout (stochastic mask via pltpu.prng_*) not
    # implemented; inference-mode dropout is the identity.
    # Second linear partial product for this H chunk, f32 accumulation.
    acc_ref[...] += jnp.dot(h.astype(w2_ref.dtype), w2_ref[...],
                            preferred_element_type=jnp.float32)

    @pl.when(j == pl.num_programs(1) - 1)
    def _():
        o_ref[...] = (acc_ref[...] + b2_ref[...]).astype(o_ref.dtype)


def prepare_params(w1, b1, w2, b2, *, compute_dtype=jnp.bfloat16):
    """One-time weight preparation (hoisted out of the per-call path).

    Pads H and C up to multiples of 128 (zero pads are inert: relu(0)=0 and
    zero rows of W2 contribute nothing) and casts weights to the MXU compute
    dtype / biases to f32 row vectors.

    w1: [F_in, H], b1: [H], w2: [H, C], b2: [C]  ([in, out] layout, i.e. the
    transpose of PyTorch nn.Linear's [out, in] weight).
    """
    F_in, H = w1.shape
    C = int(w2.shape[1])
    H_pad = _round_up(H, _LANE)
    C_pad = _round_up(C, _LANE)
    if H_pad != H:
        w1 = jnp.pad(w1, ((0, 0), (0, H_pad - H)))
        b1 = jnp.pad(b1, ((0, H_pad - H),))
        w2 = jnp.pad(w2, ((0, H_pad - H), (0, 0)))
    if C_pad != C:
        w2 = jnp.pad(w2, ((0, 0), (0, C_pad - C)))
        b2 = jnp.pad(b2, ((0, C_pad - C),))
    w1p = w1.astype(compute_dtype)
    w2p = w2.astype(compute_dtype)
    b1p = b1.reshape(1, H_pad).astype(jnp.float32)
    b2p = b2.reshape(1, C_pad).astype(jnp.float32)
    return w1p, b1p, w2p, b2p, C


@functools.partial(
    jax.jit,
    static_argnames=("out_features", "tile_m", "hidden_block", "out_dtype",
                     "single_buffer_weights"))
def _forward(x, w1p, b1p, w2p, b2p, *, out_features, tile_m, hidden_block,
             out_dtype, single_buffer_weights):
    orig_shape = x.shape
    F_in = orig_shape[-1]
    M = int(np.prod(orig_shape[:-1])) if len(orig_shape) > 1 else 1
    H_pad = w1p.shape[1]
    C_pad = w2p.shape[1]
    C = out_features
    out_dt = np.dtype(out_dtype) if out_dtype is not None else x.dtype
    cb = np.dtype(w1p.dtype).itemsize
    xb = np.dtype(x.dtype).itemsize
    ob = np.dtype(out_dt).itemsize

    x2d = x.reshape(M, F_in)

    # ---- M tile: as large as requested, never (much) bigger than the problem.
    tm = min(tile_m, _round_up(M, _M_ALIGN))
    tm = max(_round_up(tm, _M_ALIGN), _M_ALIGN)
    # Split tiny problems across TensorCores only on multi-core (v7x) parts;
    # on single-TC v5e/v6e the extra grid step is pure overhead.
    if _NUM_CORES > 1 and pl.cdiv(M, tm) < _NUM_CORES and tm > _M_ALIGN:
        tm = max(_round_up(pl.cdiv(M, _NUM_CORES), _M_ALIGN), _M_ALIGN)

    # ---- H chunk candidates: multiples of 128 that evenly divide H_pad.
    h_cands = [d for d in range(H_pad, 0, -_LANE) if H_pad % d == 0]
    th = H_pad
    if hidden_block is not None:
        th = next((d for d in h_cands if d <= hidden_block), h_cands[-1])

    def vmem_bytes(tm_, th_):
        n_h = pl.cdiv(H_pad, th_)
        inv_bufs = 1 if single_buffer_weights else 2   # grid-invariant blocks
        w_bufs = inv_bufs if n_h == 1 else 2           # H-varying weight blocks
        wb = w_bufs * (F_in * th_ * cb                 # W1 block
                       + 8 * th_ * 4                   # b1 block (sublane pad)
                       + th_ * C_pad * cb)             # W2 block
        wb += inv_bufs * 8 * C_pad * 4                 # b2 block (invariant)
        sb = (2 * tm_ * F_in * xb                      # x tile (double-buffered)
              + 2 * tm_ * C_pad * ob                   # out tile (double-buffered)
              + tm_ * C_pad * 4                        # f32 accumulator scratch
              + tm_ * th_ * (4 + cb))                  # f32 hidden + bf16 copy
        return wb + sb

    # ---- VMEM-aware sizing: shrink the M tile only down to _MIN_TM, then
    # chunk the hidden dim (keeps the MXU M-dim occupied on v7x's 64 MiB).
    while 1.25 * vmem_bytes(tm, th) > _VMEM_BUDGET:
        if tm > _MIN_TM:
            tm = max(_round_up(tm // 2, _M_ALIGN), _M_ALIGN)
            continue
        smaller = [d for d in h_cands if d < th]
        if smaller:
            th = smaller[0]
            continue
        if tm > _M_ALIGN:
            tm = max(_round_up(tm // 2, _M_ALIGN), _M_ALIGN)
            continue
        break

    n_m = pl.cdiv(M, tm)          # ragged last M block: Pallas masks OOB rows
    n_h = H_pad // th
    vmem_limit = int(min(max(1.35 * vmem_bytes(tm, th) + (2 << 20), 32 << 20),
                         _VMEM_CAP - (8 << 20)))

    def invariant_spec(shape):
        # Grid-invariant blocks (weights/biases): single-buffer — they are
        # never re-DMA'd across grid steps, so the second buffer is waste.
        index_map = lambda i, j: (0, 0)
        if single_buffer_weights and hasattr(pl, "Buffered"):
            try:
                return pl.BlockSpec(shape, index_map,
                                    pipeline_mode=pl.Buffered(1))
            except (TypeError, ValueError):
                pass
        return pl.BlockSpec(shape, index_map)

    if n_h == 1:
        w1_spec = invariant_spec((F_in, th))
        b1_spec = invariant_spec((1, th))
        w2_spec = invariant_spec((th, C_pad))
    else:
        w1_spec = pl.BlockSpec((F_in, th), lambda i, j: (0, j))
        b1_spec = pl.BlockSpec((1, th), lambda i, j: (0, j))
        w2_spec = pl.BlockSpec((th, C_pad), lambda i, j: (j, 0))
    b2_spec = invariant_spec((1, C_pad))

    out2d = pl.pallas_call(
        _mlp_kernel,
        out_shape=jax.ShapeDtypeStruct((M, C_pad), out_dt),
        grid_spec=pltpu.PrefetchScalarGridSpec(
            num_scalar_prefetch=0,
            grid=(n_m, n_h),
            in_specs=[
                pl.BlockSpec((tm, F_in), lambda i, j: (i, 0)),  # activations
                w1_spec, b1_spec, w2_spec, b2_spec,
            ],
            out_specs=pl.BlockSpec((tm, C_pad), lambda i, j: (i, 0)),
            scratch_shapes=[pltpu.VMEM((tm, C_pad), jnp.float32)],
        ),
        compiler_params=pltpu.CompilerParams(
            dimension_semantics=("parallel", "arbitrary"),
            vmem_limit_bytes=vmem_limit,
        ),
    )(x2d, w1p, b1p, w2p, b2p)

    out = out2d if C == C_pad else out2d[:, :C]
    return out.reshape(*orig_shape[:-1], C)


_SINGLE_BUFFER_OK = [True]


def linear_model_forward(x, params, *, tile_m=512, hidden_block=None,
                         out_dtype=None):
    """x: [B, T, F_in]; params from prepare_params() -> [B, T, C]."""
    w1p, b1p, w2p, b2p, out_features = params
    if _SINGLE_BUFFER_OK[0]:
        try:
            return _forward(x, w1p, b1p, w2p, b2p, out_features=out_features,
                            tile_m=tile_m, hidden_block=hidden_block,
                            out_dtype=out_dtype, single_buffer_weights=True)
        except Exception:
            # pl.Buffered(1) unsupported by this JAX/Mosaic version: fall back
            # to default double-buffered weight blocks (slightly more VMEM).
            _SINGLE_BUFFER_OK[0] = False
    return _forward(x, w1p, b1p, w2p, b2p, out_features=out_features,
                    tile_m=tile_m, hidden_block=hidden_block,
                    out_dtype=out_dtype, single_buffer_weights=False)


def _xavier_uniform(key, fan_in, fan_out, gain=1.0, dtype=jnp.float32):
    """Matches torch.nn.init.xavier_uniform_ (returned as [fan_in, fan_out])."""
    limit = gain * np.sqrt(6.0 / (fan_in + fan_out))
    return jax.random.uniform(key, (fan_in, fan_out), dtype=dtype,
                              minval=-limit, maxval=limit)


def make_params(key, in_features, hidden_units, out_features, dtype=jnp.float32):
    k1, k2 = jax.random.split(key)
    relu_gain = float(np.sqrt(2.0))  # init.calculate_gain('relu')
    w1 = _xavier_uniform(k1, in_features, hidden_units, gain=relu_gain, dtype=dtype)
    b1 = jnp.zeros((hidden_units,), dtype=dtype)
    w2 = _xavier_uniform(k2, hidden_units, out_features, gain=relu_gain, dtype=dtype)
    b2 = jnp.zeros((out_features,), dtype=dtype)
    return w1, b1, w2, b2


def _ref_forward(x, w1, b1, w2, b2, compute_dtype=jnp.bfloat16):
    """Plain-JAX reference emulating the kernel's bf16-input / f32-accum math."""
    rd = lambda a: a.astype(compute_dtype).astype(jnp.float32)
    lead = x.shape[:-1]
    x2 = rd(x.reshape(-1, x.shape[-1]))
    h = jnp.maximum(x2 @ rd(w1) + b1.astype(jnp.float32), 0.0)
    o = rd(h) @ rd(w2) + b2.astype(jnp.float32)
    return o.reshape(*lead, -1).astype(x.dtype)


if __name__ == "__main__":
    key = jax.random.PRNGKey(0)
    kx, kp, kb1, kb2, kx2, kp2, kx3, kp3 = jax.random.split(key, 8)

    # Case 1: lane-aligned small shapes (scaled-down LinearModel defaults).
    B, T = 2, 16
    in_features, hidden_units, out_features = 256, 256, 128
    x = jax.random.normal(kx, (B, T, in_features), dtype=jnp.float32)
    w1, b1, w2, b2 = make_params(kp, in_features, hidden_units, out_features)
    # Non-zero biases so the bias-add path is actually exercised.
    b1 = 0.1 * jax.random.normal(kb1, (hidden_units,), dtype=jnp.float32)
    b2 = 0.1 * jax.random.normal(kb2, (out_features,), dtype=jnp.float32)
    params = prepare_params(w1, b1, w2, b2)

    out = linear_model_forward(x, params)
    jax.block_until_ready(out)
    ref = _ref_forward(x, w1, b1, w2, b2)
    assert out.shape == (B, T, out_features)
    assert jnp.allclose(out, ref, atol=1e-2, rtol=1e-2)

    # Case 2: awkward shapes — ragged rows (B*T = 30, not a tile multiple,
    # handled by Pallas OOB masking) and H/C lane-padding (160->256, 88->128).
    B2, T2 = 2, 15
    f2, h2, c2 = 192, 160, 88
    x_b = jax.random.normal(kx2, (B2, T2, f2), dtype=jnp.float32)
    w1b, b1b, w2b, b2b = make_params(kp2, f2, h2, c2)
    out_b = linear_model_forward(x_b, prepare_params(w1b, b1b, w2b, b2b))
    jax.block_until_ready(out_b)
    ref_b = _ref_forward(x_b, w1b, b1b, w2b, b2b)
    assert out_b.shape == (B2, T2, c2)
    assert jnp.allclose(out_b, ref_b, atol=1e-2, rtol=1e-2)

    # Case 3: exercise the hidden-dim reduction path (grid axis over H chunks
    # with an f32 accumulator) used when H would not fit in VMEM on v7x.
    B3, T3 = 2, 24
    f3, h3, c3 = 128, 512, 128
    x_c = jax.random.normal(kx3, (B3, T3, f3), dtype=jnp.float32)
    w1c, b1c, w2c, b2c = make_params(kp3, f3, h3, c3)
    out_c = linear_model_forward(x_c, prepare_params(w1c, b1c, w2c, b2c),
                                 hidden_block=128)
    jax.block_until_ready(out_c)
    ref_c = _ref_forward(x_c, w1c, b1c, w2c, b2c)
    assert out_c.shape == (B3, T3, c3)
    assert jnp.allclose(out_c, ref_c, atol=1e-2, rtol=1e-2)

    print("KERNEL_OK")
</pallas_src>

<mosaic_0001>
module attributes {stable_mosaic.version = 11 : i64} {
  func.func @_mlp_kernel(%arg0: i32, %arg1: i32, %arg2: memref<32x256xf32, #tpu.memory_space<vmem>>, %arg3: memref<256x256xbf16, #tpu.memory_space<vmem>>, %arg4: memref<1x256xf32, #tpu.memory_space<vmem>>, %arg5: memref<256x128xbf16, #tpu.memory_space<vmem>>, %arg6: memref<1x128xf32, #tpu.memory_space<vmem>>, %arg7: memref<32x128xf32, #tpu.memory_space<vmem>>, %arg8: memref<32x128xf32, #tpu.memory_space<vmem>>) attributes {dimension_semantics = [#tpu.dimension_semantics<parallel>, #tpu.dimension_semantics<arbitrary>], iteration_bounds = array<i64: 1, 1>, scalar_prefetch = 0 : i64, scratch_operands = 1 : i64, tpu.core_type = #tpu.core_type<tc>, window_params = [{transform_indices = @transform_0, window_bounds = array<i64: 32, 256>}, {pipeline_mode = #tpu.pipeline_mode<synchronous>, transform_indices = @transform_1, window_bounds = array<i64: 256, 256>}, {pipeline_mode = #tpu.pipeline_mode<synchronous>, transform_indices = @transform_2, window_bounds = array<i64: 1, 256>}, {pipeline_mode = #tpu.pipeline_mode<synchronous>, transform_indices = @transform_3, window_bounds = array<i64: 256, 128>}, {pipeline_mode = #tpu.pipeline_mode<synchronous>, transform_indices = @transform_4, window_bounds = array<i64: 1, 128>}, {transform_indices = @transform_5, window_bounds = array<i64: 32, 128>}]} {
    %c0_i32 = arith.constant 0 : i32
    %0 = arith.cmpi eq, %arg1, %c0_i32 : i32
    %1 = arith.extui %0 : i1 to i32
    %c0_i32_0 = arith.constant 0 : i32
    %2 = arith.cmpi ne, %1, %c0_i32_0 : i32
    scf.if %2 {
      %cst_16 = arith.constant 0.000000e+00 : f32
      %21 = vector.broadcast %cst_16 : f32 to vector<32x128xf32>
      %c0_17 = arith.constant 0 : index
      %c0_18 = arith.constant 0 : index
      %22 = vector.load %arg8[%c0_17, %c0_18] : memref<32x128xf32, #tpu.memory_space<vmem>>, vector<32x128xf32>
      tpu.vector_store %arg8[%c0_17, %c0_18], %21 {strides = array<i32>} : memref<32x128xf32, #tpu.memory_space<vmem>>, vector<32x128xf32>,
    } else {
    }
    %c0 = arith.constant 0 : index
    %c0_1 = arith.constant 0 : index
    %3 = vector.load %arg2[%c0, %c0_1] : memref<32x256xf32, #tpu.memory_space<vmem>>, vector<32x256xf32>
    %4 = arith.truncf %3 : vector<32x256xf32> to vector<32x256xbf16>
    %c0_2 = arith.constant 0 : index
    %c0_3 = arith.constant 0 : index
    %5 = vector.load %arg3[%c0_2, %c0_3] : memref<256x256xbf16, #tpu.memory_space<vmem>>, vector<256x256xbf16>
    %cst = arith.constant dense<0.000000e+00> : vector<32x256xf32>
    %6 = tpu.matmul %4, %5, %cst {dimension_numbers = #tpu.dot_dimension_numbers<[1], [0], [0], [1], [0, 0, 1, 1], [], []>} : vector<32x256xbf16>, vector<256x256xbf16>, vector<32x256xf32> -> vector<32x256xf32>
    %c0_4 = arith.constant 0 : index
    %c0_5 = arith.constant 0 : index
    %7 = vector.load %arg4[%c0_4, %c0_5] : memref<1x256xf32, #tpu.memory_space<vmem>>, vector<1x256xf32>
    %8 = vector.broadcast %7 : vector<1x256xf32> to vector<32x256xf32>
    %9 = arith.addf %6, %8 : vector<32x256xf32>
    %cst_6 = arith.constant 0.000000e+00 : f32
    %10 = vector.broadcast %cst_6 : f32 to vector<32x256xf32>
    %11 = arith.maximumf %9, %10 : vector<32x256xf32>
    %c0_7 = arith.constant 0 : index
    %c0_8 = arith.constant 0 : index
    %12 = vector.load %arg8[%c0_7, %c0_8] : memref<32x128xf32, #tpu.memory_space<vmem>>, vector<32x128xf32>
    %13 = arith.truncf %11 : vector<32x256xf32> to vector<32x256xbf16>
    %c0_9 = arith.constant 0 : index
    %c0_10 = arith.constant 0 : index
    %14 = vector.load %arg5[%c0_9, %c0_10] : memref<256x128xbf16, #tpu.memory_space<vmem>>, vector<256x128xbf16>
    %cst_11 = arith.constant dense<0.000000e+00> : vector<32x128xf32>
    %15 = tpu.matmul %13, %14, %cst_11 {dimension_numbers = #tpu.dot_dimension_numbers<[1], [0], [0], [1], [0, 0, 1, 1], [], []>} : vector<32x256xbf16>, vector<256x128xbf16>, vector<32x128xf32> -> vector<32x128xf32>
    %16 = arith.addf %12, %15 : vector<32x128xf32>
    %c0_12 = arith.constant 0 : index
    %c0_13 = arith.constant 0 : index
    %17 = vector.load %arg8[%c0_12, %c0_13] : memref<32x128xf32, #tpu.memory_space<vmem>>, vector<32x128xf32>
    tpu.vector_store %arg8[%c0_12, %c0_13], %16 {strides = array<i32>} : memref<32x128xf32, #tpu.memory_space<vmem>>, vector<32x128xf32>,
    %c0_i32_14 = arith.constant 0 : i32
    %18 = arith.cmpi eq, %arg1, %c0_i32_14 : i32
    %19 = arith.extui %18 : i1 to i32
    %c0_i32_15 = arith.constant 0 : i32
    %20 = arith.cmpi ne, %19, %c0_i32_15 : i32
    scf.if %20 {
      %c0_16 = arith.constant 0 : index
      %c0_17 = arith.constant 0 : index
      %21 = vector.load %arg8[%c0_16, %c0_17] : memref<32x128xf32, #tpu.memory_space<vmem>>, vector<32x128xf32>
      %c0_18 = arith.constant 0 : index
      %c0_19 = arith.constant 0 : index
      %22 = vector.load %arg6[%c0_18, %c0_19] : memref<1x128xf32, #tpu.memory_space<vmem>>, vector<1x128xf32>
      %23 = vector.broadcast %22 : vector<1x128xf32> to vector<32x128xf32>
      %24 = arith.addf %21, %23 : vector<32x128xf32>
      %c0_20 = arith.constant 0 : index
      %c0_21 = arith.constant 0 : index
      %25 = vector.load %arg7[%c0_20, %c0_21] : memref<32x128xf32, #tpu.memory_space<vmem>>, vector<32x128xf32>
      tpu.vector_store %arg7[%c0_20, %c0_21], %24 {strides = array<i32>} : memref<32x128xf32, #tpu.memory_space<vmem>>, vector<32x128xf32>,
    } else {
    }
    return
  }
  func.func @transform_0(%arg0: i32, %arg1: i32) -> (i32, i32) {
    %c0_i32 = arith.constant 0 : i32
    %c0_i32_0 = arith.constant 0 : i32
    return %arg0, %c0_i32 : i32, i32
  }
  func.func @transform_1(%arg0: i32, %arg1: i32) -> (i32, i32) {
    %c0_i32 = arith.constant 0 : i32
    %c0_i32_0 = arith.constant 0 : i32
    %c0_i32_1 = arith.constant 0 : i32
    return %c0_i32, %c0_i32_0 : i32, i32
  }
  func.func @transform_2(%arg0: i32, %arg1: i32) -> (i32, i32) {
    %c0_i32 = arith.constant 0 : i32
    %c0_i32_0 = arith.constant 0 : i32
    %c0_i32_1 = arith.constant 0 : i32
    return %c0_i32, %c0_i32_0 : i32, i32
  }
  func.func @transform_3(%arg0: i32, %arg1: i32) -> (i32, i32) {
    %c0_i32 = arith.constant 0 : i32
    %c0_i32_0 = arith.constant 0 : i32
    %c0_i32_1 = arith.constant 0 : i32
    return %c0_i32, %c0_i32_0 : i32, i32
  }
  func.func @transform_4(%arg0: i32, %arg1: i32) -> (i32, i32) {
    %c0_i32 = arith.constant 0 : i32
    %c0_i32_0 = arith.constant 0 : i32
    %c0_i32_1 = arith.constant 0 : i32
    return %c0_i32, %c0_i32_0 : i32, i32
  }
  func.func @transform_5(%arg0: i32, %arg1: i32) -> (i32, i32) {
    %c0_i32 = arith.constant 0 : i32
    %c0_i32_0 = arith.constant 0 : i32
    return %arg0, %c0_i32 : i32, i32
  }
}

module attributes {stable_mosaic.version = 11 : i64} {
  func.func @_mlp_kernel(%arg0: i32, %arg1: i32, %arg2: memref<32x256xf32, #tpu.memory_space<vmem>>, %arg3: memref<256x256xbf16, #tpu.memory_space<vmem>>, %arg4: memref<1x256xf32, #tpu.memory_space<vmem>>, %arg5: memref<256x128xbf16, #tpu.memory_space<vmem>>, %arg6: memref<1x128xf32, #tpu.memory_space<vmem>>, %arg7: memref<32x128xf32, #tpu.memory_space<vmem>>, %arg8: memref<32x128xf32, #tpu.memory_space<vmem>>) attributes {dimension_semantics = [#tpu.dimension_semantics<parallel>, #tpu.dimension_semantics<arbitrary>], iteration_bounds = array<i64: 1, 1>, scalar_prefetch = 0 : i64, scratch_operands = 1 : i64, tpu.core_type = #tpu.core_type<tc>, window_params = [{transform_indices = @transform_0, window_bounds = array<i64: 32, 256>}, {pipeline_mode = #tpu.pipeline_mode<synchronous>, transform_indices = @transform_1, window_bounds = array<i64: 256, 256>}, {pipeline_mode = #tpu.pipeline_mode<synchronous>, transform_indices = @transform_2, window_bounds = array<i64: 1, 256>}, {pipeline_mode = #tpu.pipeline_mode<synchronous>, transform_indices = @transform_3, window_bounds = array<i64: 256, 128>}, {pipeline_mode = #tpu.pipeline_mode<synchronous>, transform_indices = @transform_4, window_bounds = array<i64: 1, 128>}, {transform_indices = @transform_5, window_bounds = array<i64: 32, 128>}]} {
    %c0_i32 = arith.constant 0 : i32
    %0 = arith.cmpi eq, %arg1, %c0_i32 : i32
    %1 = arith.extui %0 : i1 to i32
    %c0_i32_0 = arith.constant 0 : i32
    %2 = arith.cmpi ne, %1, %c0_i32_0 : i32
    scf.if %2 {
      %cst_16 = arith.constant 0.000000e+00 : f32
      %21 = vector.broadcast %cst_16 : f32 to vector<32x128xf32>
      %c0_17 = arith.constant 0 : index
      %c0_18 = arith.constant 0 : index
      %22 = vector.load %arg8[%c0_17, %c0_18] : memref<32x128xf32, #tpu.memory_space<vmem>>, vector<32x128xf32>
      tpu.vector_store %arg8[%c0_17, %c0_18], %21 {strides = array<i32>} : memref<32x128xf32, #tpu.memory_space<vmem>>, vector<32x128xf32>,
    } else {
    }
    %c0 = arith.constant 0 : index
    %c0_1 = arith.constant 0 : index
    %3 = vector.load %arg2[%c0, %c0_1] : memref<32x256xf32, #tpu.memory_space<vmem>>, vector<32x256xf32>
    %4 = arith.truncf %3 : vector<32x256xf32> to vector<32x256xbf16>
    %c0_2 = arith.constant 0 : index
    %c0_3 = arith.constant 0 : index
    %5 = vector.load %arg3[%c0_2, %c0_3] : memref<256x256xbf16, #tpu.memory_space<vmem>>, vector<256x256xbf16>
    %cst = arith.constant dense<0.000000e+00> : vector<32x256xf32>
    %6 = tpu.matmul %4, %5, %cst {dimension_numbers = #tpu.dot_dimension_numbers<[1], [0], [0], [1], [0, 0, 1, 1], [], []>} : vector<32x256xbf16>, vector<256x256xbf16>, vector<32x256xf32> -> vector<32x256xf32>
    %c0_4 = arith.constant 0 : index
    %c0_5 = arith.constant 0 : index
    %7 = vector.load %arg4[%c0_4, %c0_5] : memref<1x256xf32, #tpu.memory_space<vmem>>, vector<1x256xf32>
    %8 = vector.broadcast %7 : vector<1x256xf32> to vector<32x256xf32>
    %9 = arith.addf %6, %8 : vector<32x256xf32>
    %cst_6 = arith.constant 0.000000e+00 : f32
    %10 = vector.broadcast %cst_6 : f32 to vector<32x256xf32>
    %11 = arith.maximumf %9, %10 : vector<32x256xf32>
    %c0_7 = arith.constant 0 : index
    %c0_8 = arith.constant 0 : index
    %12 = vector.load %arg8[%c0_7, %c0_8] : memref<32x128xf32, #tpu.memory_space<vmem>>, vector<32x128xf32>
    %13 = arith.truncf %11 : vector<32x256xf32> to vector<32x256xbf16>
    %c0_9 = arith.constant 0 : index
    %c0_10 = arith.constant 0 : index
    %14 = vector.load %arg5[%c0_9, %c0_10] : memref<256x128xbf16, #tpu.memory_space<vmem>>, vector<256x128xbf16>
    %cst_11 = arith.constant dense<0.000000e+00> : vector<32x128xf32>
    %15 = tpu.matmul %13, %14, %cst_11 {dimension_numbers = #tpu.dot_dimension_numbers<[1], [0], [0], [1], [0, 0, 1, 1], [], []>} : vector<32x256xbf16>, vector<256x128xbf16>, vector<32x128xf32> -> vector<32x128xf32>
    %16 = arith.addf %12, %15 : vector<32x128xf32>
    %c0_12 = arith.constant 0 : index
    %c0_13 = arith.constant 0 : index
    %17 = vector.load %arg8[%c0_12, %c0_13] : memref<32x128xf32, #tpu.memory_space<vmem>>, vector<32x128xf32>
    tpu.vector_store %arg8[%c0_12, %c0_13], %16 {strides = array<i32>} : memref<32x128xf32, #tpu.memory_space<vmem>>, vector<32x128xf32>,
    %c0_i32_14 = arith.constant 0 : i32
    %18 = arith.cmpi eq, %arg1, %c0_i32_14 : i32
    %19 = arith.extui %18 : i1 to i32
    %c0_i32_15 = arith.constant 0 : i32
    %20 = arith.cmpi ne, %19, %c0_i32_15 : i32
    scf.if %20 {
      %c0_16 = arith.constant 0 : index
      %c0_17 = arith.constant 0 : index
      %21 = vector.load %arg8[%c0_16, %c0_17] : memref<32x128xf32, #tpu.memory_space<vmem>>, vector<32x128xf32>
      %c0_18 = arith.constant 0 : index
      %c0_19 = arith.constant 0 : index
      %22 = vector.load %arg6[%c0_18, %c0_19] : memref<1x128xf32, #tpu.memory_space<vmem>>, vector<1x128xf32>
      %23 = vector.broadcast %22 : vector<1x128xf32> to vector<32x128xf32>
      %24 = arith.addf %21, %23 : vector<32x128xf32>
      %c0_20 = arith.constant 0 : index
      %c0_21 = arith.constant 0 : index
      %25 = vector.load %arg7[%c0_20, %c0_21] : memref<32x128xf32, #tpu.memory_space<vmem>>, vector<32x128xf32>
      tpu.vector_store %arg7[%c0_20, %c0_21], %24 {strides = array<i32>} : memref<32x128xf32, #tpu.memory_space<vmem>>, vector<32x128xf32>,
    } else {
    }
    return
  }
  func.func @transform_0(%arg0: i32, %arg1: i32) -> (i32, i32) {
    %c0_i32 = arith.constant 0 : i32
    %c0_i32_0 = arith.constant 0 : i32
    return %arg0, %c0_i32 : i32, i32
  }
  func.func @transform_1(%arg0: i32, %arg1: i32) -> (i32, i32) {
    %c0_i32 = arith.constant 0 : i32
    %c0_i32_0 = arith.constant 0 : i32
    %c0_i32_1 = arith.constant 0 : i32
    return %c0_i32, %c0_i32_0 : i32, i32
  }
  func.func @transform_2(%arg0: i32, %arg1: i32) -> (i32, i32) {
    %c0_i32 = arith.constant 0 : i32
    %c0_i32_0 = arith.constant 0 : i32
    %c0_i32_1 = arith.constant 0 : i32
    return %c0_i32, %c0_i32_0 : i32, i32
  }
  func.func @transform_3(%arg0: i32, %arg1: i32) -> (i32, i32) {
    %c0_i32 = arith.constant 0 : i32
    %c0_i32_0 = arith.constant 0 : i32
    %c0_i32_1 = arith.constant 0 : i32
    return %c0_i32, %c0_i32_0 : i32, i32
  }
  func.func @transform_4(%arg0: i32, %arg1: i32) -> (i32, i32) {
    %c0_i32 = arith.constant 0 : i32
    %c0_i32_0 = arith.constant 0 : i32
    %c0_i32_1 = arith.constant 0 : i32
    return %c0_i32, %c0_i32_0 : i32, i32
  }
  func.func @transform_5(%arg0: i32, %arg1: i32) -> (i32, i32) {
    %c0_i32 = arith.constant 0 : i32
    %c0_i32_0 = arith.constant 0 : i32
    return %arg0, %c0_i32 : i32, i32
  }
}

</mosaic_0001>

<llo_original>
// kernel: _forward.1
$region0: #{_forward.1}
  #allocation0 [shape = 'u32[]', space=smem, size = 0x4, offset = 0x4, fixed_abs, tag = 'smem constant byte address 0x4 - core index']
  #allocation1 [shape = 'u32[144,128]{1,0:T(1,128)}', space=vmem, size = 0x12000, scoped, tag = 'internal scratch']
  #allocation2 [shape = 'f32[32,128]{1,0:T(8,128)}', space=vmem, size = 0x4000, scoped, tag = 'scratch operand']
  %s0 = inlined_call_operand.hbm [shape: f32[32,256], index: 0, kind: input, shape index: {}]
  %s1 = inlined_call_operand.hbm [shape: bf16[256,256], index: 1, kind: input, shape index: {}]
  %s2 = inlined_call_operand.vmem [shape: f32[1,256], index: 2, kind: input, shape index: {}]
  %s3 = inlined_call_operand.hbm [shape: bf16[256,128], index: 3, kind: input, shape index: {}]
  %s4 = inlined_call_operand.vmem [shape: f32[1,128], index: 4, kind: input, shape index: {}]
  %s5 = inlined_call_operand.hbm [shape: f32[32,128], index: 5, kind: output, shape index: {}]
  %s6 = sld [smem:[#allocation0]]
  $region50: #{_forward.1} parent=0
    _
  %s8 = ssub.s32 1, %s6
  %s9 = scalar_select 0, %s8, %s6
  $region1: #{_forward.1} parent=0
    #allocation3 [shape = 'u8[32768]{0}', space=vmem, size = 0x8000, scoped, tag = 'input window, operand 0, single buffered']
    #allocation4 [shape = 's32[1]{0}', space=sflag, size = 0x4, scoped, tag = 'scoped memory for _forward.1']
    #allocation5 [shape = 's32[1]{0}', space=sflag, size = 0x4, scoped, tag = 'scoped memory for _forward.1']
    #allocation6 [shape = 'u8[131072]{0}', space=vmem, size = 0x20000, scoped, tag = 'input window, operand 1, single buffered']
    #allocation7 [shape = 's32[1]{0}', space=sflag, size = 0x4, scoped, tag = 'scoped memory for _forward.1']
    #allocation8 [shape = 'u8[65536]{0}', space=vmem, size = 0x10000, scoped, tag = 'input window, operand 3, single buffered']
    #allocation9 [shape = 'u8[16384]{0}', space=vmem, size = 0x4000, scoped, tag = 'output window, operand 0, single buffered']
    %10 = vsyncpa [#allocation4], 0
    %11 = vsyncpa [#allocation7], 0
    %12 = vsyncpa [#allocation5], 0
    // Predicated region
    $region2: #{_forward.1} parent=1 // pred_check
      _
    $region3: #{_forward.1} parent=1 // pred_check_branch
      %14 = sbr.rel (0) target = $region5
    $region4: #{_forward.1} parent=1 // pred_region
      %s16 = ssub.s32 1024, 1024
      %17 = vsyncadd [#allocation4], %s16
      %s18 = sshll.u32 [#allocation3], 4
      %s19 = int_to_ptr.vmem [resolvable:$true] %s18
      %24 = dma.hbm_to_vmem [thread:$0]  %s0, 1024, %s19, [#allocation4], 256, 256, 16
    $region5: #{_forward.1} parent=1 // pred_fallthru
      _
    // Predicated region
    $region6: #{_forward.1} parent=1 // pred_check
      _
    $region7: #{_forward.1} parent=1 // pred_check_branch
      %26 = sbr.rel (0) target = $region9
    $region8: #{_forward.1} parent=1 // pred_region
      %s28 = ssub.s32 4096, 4096
      %29 = vsyncadd [#allocation7], %s28
      %s30 = sshll.u32 [#allocation6], 4
      %s31 = int_to_ptr.vmem [resolvable:$true] %s30
      %36 = dma.hbm_to_vmem [thread:$0]  %s1, 4096, %s31, [#allocation7], 128, 128, 8
    $region9: #{_forward.1} parent=1 // pred_fallthru
      _
    // Predicated region
    $region10: #{_forward.1} parent=1 // pred_check
      _
    $region11: #{_forward.1} parent=1 // pred_check_branch
      %38 = sbr.rel (0) target = $region13
    $region12: #{_forward.1} parent=1 // pred_region
      _
    $region13: #{_forward.1} parent=1 // pred_fallthru
      _
    // Predicated region
    $region14: #{_forward.1} parent=1 // pred_check
      _
    $region15: #{_forward.1} parent=1 // pred_check_branch
      %40 = sbr.rel (0) target = $region17
    $region16: #{_forward.1} parent=1 // pred_region
      %s42 = ssub.s32 2048, 2048
      %43 = vsyncadd [#allocation7], %s42
      %s44 = sshll.u32 [#allocation8], 4
      %s45 = int_to_ptr.vmem [resolvable:$true] %s44
      %50 = dma.hbm_to_vmem [thread:$0]  %s3, 2048, %s45, [#allocation7], 64, 64, 4
    $region17: #{_forward.1} parent=1 // pred_fallthru
      _
    // Predicated region
    $region18: #{_forward.1} parent=1 // pred_check
      _
    $region19: #{_forward.1} parent=1 // pred_check_branch
      %52 = sbr.rel (0) target = $region21
    $region20: #{_forward.1} parent=1 // pred_region
      _
    $region21: #{_forward.1} parent=1 // pred_fallthru
      _
    // Predicated region
    $region22: #{_forward.1} parent=1 // pred_check
      _
    $region23: #{_forward.1} parent=1 // pred_check_branch
      %54 = sbr.rel (0) target = $region25
    $region24: #{_forward.1} parent=1 // pred_region
      %55 = dma.done [#allocation4], 1024
    $region25: #{_forward.1} parent=1 // pred_fallthru
      _
    // Predicated region
    $region26: #{_forward.1} parent=1 // pred_check
      _
    $region27: #{_forward.1} parent=1 // pred_check_branch
      %57 = sbr.rel (0) target = $region29
    $region28: #{_forward.1} parent=1 // pred_region
      %58 = dma.done [#allocation7], 4096
    $region29: #{_forward.1} parent=1 // pred_fallthru
      _
    // Predicated region
    $region30: #{_forward.1} parent=1 // pred_check
      _
    $region31: #{_forward.1} parent=1 // pred_check_branch
      %60 = sbr.rel (0) target = $region33
    $region32: #{_forward.1} parent=1 // pred_region
      %61 = dma.done [#allocation7], 2048
    $region33: #{_forward.1} parent=1 // pred_fallthru
      _
    %p63 = scmp.eq.s32.totalorder 0, 0
    // Predicated region
    $region34: #{_forward.1} parent=1 // pred_check
      %p64 = pneg %p63
    $region35: #{_forward.1} parent=1 // pred_check_branch
      %66 = sbr.rel (%p64) target = $region37
    $region36: #{_forward.1} parent=1 // pred_region
      %67 = vst [vmem:[#allocation2] sm:$0xff] 0.0
      %68 = vst [vmem:[#allocation2 + $0x8] sm:$0xff] 0.0
      %69 = vst [vmem:[#allocation2 + $0x10] sm:$0xff] 0.0
      %70 = vst [vmem:[#allocation2 + $0x18] sm:$0xff] 0.0
    $region37: #{_forward.1} parent=1 // pred_fallthru
      _
    %v71 = vld [vmem:[#allocation3] sm:$0xff]
    %v72 = vld [vmem:[#allocation3 + $0x8] sm:$0xff]
    %v73 = vld [vmem:[#allocation3 + $0x10] sm:$0xff]
    %v74 = vld [vmem:[#allocation3 + $0x18] sm:$0xff]
    %v75 = vld [vmem:[#allocation3 + $0x20] sm:$0xff]
    %v76 = vld [vmem:[#allocation3 + $0x28] sm:$0xff]
    %v77 = vld [vmem:[#allocation3 + $0x30] sm:$0xff]
    %v78 = vld [vmem:[#allocation3 + $0x38] sm:$0xff]
    %v79 = vpack.c.bf16 %v73, %v71
    %v80 = vpack.c.bf16 %v74, %v72
    %v81 = vpack.c.bf16 %v77, %v75
    %v82 = vpack.c.bf16 %v78, %v76
    %v83 = vld [vmem:[#allocation6] sm:$0xff]
    %v84 = vld [vmem:[#allocation6 + $0x8] sm:$0xff]
    %v85 = vld [vmem:[#allocation6 + $0x10] sm:$0xff]
    %v86 = vld [vmem:[#allocation6 + $0x18] sm:$0xff]
    %v87 = vld [vmem:[#allocation6 + $0x20] sm:$0xff]
    %v88 = vld [vmem:[#allocation6 + $0x28] sm:$0xff]
    %v89 = vld [vmem:[#allocation6 + $0x30] sm:$0xff]
    %v90 = vld [vmem:[#allocation6 + $0x38] sm:$0xff]
    %v91 = vld [vmem:[#allocation6 + $0x40] sm:$0xff]
    %v92 = vld [vmem:[#allocation6 + $0x48] sm:$0xff]
    %v93 = vld [vmem:[#allocation6 + $0x50] sm:$0xff]
    %v94 = vld [vmem:[#allocation6 + $0x58] sm:$0xff]
    %v95 = vld [vmem:[#allocation6 + $0x60] sm:$0xff]
    %v96 = vld [vmem:[#allocation6 + $0x68] sm:$0xff]
    %v97 = vld [vmem:[#allocation6 + $0x70] sm:$0xff]
    %v98 = vld [vmem:[#allocation6 + $0x78] sm:$0xff]
    %v99 = vld [vmem:[#allocation6 + $0x80] sm:$0xff]
    %v100 = vld [vmem:[#allocation6 + $0x88] sm:$0xff]
    %v101 = vld [vmem:[#allocation6 + $0x90] sm:$0xff]
    %v102 = vld [vmem:[#allocation6 + $0x98] sm:$0xff]
    %v103 = vld [vmem:[#allocation6 + $0xa0] sm:$0xff]
    %v104 = vld [vmem:[#allocation6 + $0xa8] sm:$0xff]
    %v105 = vld [vmem:[#allocation6 + $0xb0] sm:$0xff]
    %v106 = vld [vmem:[#allocation6 + $0xb8] sm:$0xff]
    %v107 = vld [vmem:[#allocation6 + $0xc0] sm:$0xff]
    %v108 = vld [vmem:[#allocation6 + $0xc8] sm:$0xff]
    %v109 = vld [vmem:[#allocation6 + $0xd0] sm:$0xff]
    %v110 = vld [vmem:[#allocation6 + $0xd8] sm:$0xff]
    %v111 = vld [vmem:[#allocation6 + $0xe0] sm:$0xff]
    %v112 = vld [vmem:[#allocation6 + $0xe8] sm:$0xff]
    %v113 = vld [vmem:[#allocation6 + $0xf0] sm:$0xff]
    %v114 = vld [vmem:[#allocation6 + $0xf8] sm:$0xff]
    %v115 = vld [vmem:[%s2] sm:$0x3]
    %v117 = vlaneseq
    %v118 = vshrl.u32 %v117, 7
    %v119 = vsub.s32 0, %v118
    %v120 = vrot.slane %v115, %v119
    %v121 = vlaneseq
    %v122 = vshrl.u32 %v121, 7
    %v123 = vsub.s32 1, %v122
    %v124 = vrot.slane %v115, %v123
    %v159 = vunpack.c.l.b16 %v83
    %v160 = vunpack.c.h.b16 %v83
    %v161 = vunpack.c.l.b16 %v84
    %v162 = vunpack.c.h.b16 %v84
    %v163 = vunpack.c.l.b16 %v85
    %v164 = vunpack.c.h.b16 %v85
    %v165 = vunpack.c.l.b16 %v86
    %v166 = vunpack.c.h.b16 %v86
    %v167 = vunpack.c.l.b16 %v87
    %v168 = vunpack.c.h.b16 %v87
    %v169 = vunpack.c.l.b16 %v88
    %v170 = vunpack.c.h.b16 %v88
    %v171 = vunpack.c.l.b16 %v89
    %v172 = vunpack.c.h.b16 %v89
    %v173 = vunpack.c.l.b16 %v90
    %v174 = vunpack.c.h.b16 %v90
    %v175 = vunpack.c.l.b16 %v91
    %v176 = vunpack.c.h.b16 %v91
    %v177 = vunpack.c.l.b16 %v92
    %v178 = vunpack.c.h.b16 %v92
    %v179 = vunpack.c.l.b16 %v93
    %v180 = vunpack.c.h.b16 %v93
    %v181 = vunpack.c.l.b16 %v94
    %v182 = vunpack.c.h.b16 %v94
    %v183 = vunpack.c.l.b16 %v95
    %v184 = vunpack.c.h.b16 %v95
    %v185 = vunpack.c.l.b16 %v96
    %v186 = vunpack.c.h.b16 %v96
    %v187 = vunpack.c.l.b16 %v97
    %v188 = vunpack.c.h.b16 %v97
    %v189 = vunpack.c.l.b16 %v98
    %v190 = vunpack.c.h.b16 %v98
    %v191 = vunpack.c.l.b16 %v99
    %v192 = vunpack.c.h.b16 %v99
    %v193 = vunpack.c.l.b16 %v100
    %v194 = vunpack.c.h.b16 %v100
    %v195 = vunpack.c.l.b16 %v101
    %v196 = vunpack.c.h.b16 %v101
    %v197 = vunpack.c.l.b16 %v102
    %v198 = vunpack.c.h.b16 %v102
    %v199 = vunpack.c.l.b16 %v103
    %v200 = vunpack.c.h.b16 %v103
    %v201 = vunpack.c.l.b16 %v104
    %v202 = vunpack.c.h.b16 %v104
    %v203 = vunpack.c.l.b16 %v105
    %v204 = vunpack.c.h.b16 %v105
    %v205 = vunpack.c.l.b16 %v106
    %v206 = vunpack.c.h.b16 %v106
    %v207 = vunpack.c.l.b16 %v107
    %v208 = vunpack.c.h.b16 %v107
    %v209 = vunpack.c.l.b16 %v108
    %v210 = vunpack.c.h.b16 %v108
    %v211 = vunpack.c.l.b16 %v109
    %v212 = vunpack.c.h.b16 %v109
    %v213 = vunpack.c.l.b16 %v110
    %v214 = vunpack.c.h.b16 %v110
    %v215 = vunpack.c.l.b16 %v111
    %v216 = vunpack.c.h.b16 %v111
    %v217 = vunpack.c.l.b16 %v112
    %v218 = vunpack.c.h.b16 %v112
    %v219 = vunpack.c.l.b16 %v113
    %v220 = vunpack.c.h.b16 %v113
    %v221 = vunpack.c.l.b16 %v114
    %v222 = vunpack.c.h.b16 %v114
    %v223 = vpack.c.b16 %v161, %v159
    %v224 = vpack.c.b16 %v162, %v160
    %v225 = vpack.c.b16 %v165, %v163
    %v226 = vpack.c.b16 %v166, %v164
    %v227 = vpack.c.b16 %v169, %v167
    %v228 = vpack.c.b16 %v170, %v168
    %v229 = vpack.c.b16 %v173, %v171
    %v230 = vpack.c.b16 %v174, %v172
    %v231 = vpack.c.b16 %v177, %v175
    %v232 = vpack.c.b16 %v178, %v176
    %v233 = vpack.c.b16 %v181, %v179
    %v234 = vpack.c.b16 %v182, %v180
    %v235 = vpack.c.b16 %v185, %v183
    %v236 = vpack.c.b16 %v186, %v184
    %v237 = vpack.c.b16 %v189, %v187
    %v238 = vpack.c.b16 %v190, %v188
    %v239 = vpack.c.b16 %v193, %v191
    %v240 = vpack.c.b16 %v194, %v192
    %v241 = vpack.c.b16 %v197, %v195
    %v242 = vpack.c.b16 %v198, %v196
    %v243 = vpack.c.b16 %v201, %v199
    %v244 = vpack.c.b16 %v202, %v200
    %v245 = vpack.c.b16 %v205, %v203
    %v246 = vpack.c.b16 %v206, %v204
    %v247 = vpack.c.b16 %v209, %v207
    %v248 = vpack.c.b16 %v210, %v208
    %v249 = vpack.c.b16 %v213, %v211
    %v250 = vpack.c.b16 %v214, %v212
    %v251 = vpack.c.b16 %v217, %v215
    %v252 = vpack.c.b16 %v218, %v216
    %v253 = vpack.c.b16 %v221, %v219
    %v254 = vpack.c.b16 %v222, %v220
    %287 = vmatprep.subr.bf16.mxu0 %v224
    %288 = vmatpush1.bf16.msra.mxu0 %v223
    %289 = vmatprep.subr.bf16.mxu0 %v226
    %290 = vmatpush1.bf16.msra.mxu0 %v225
    %291 = vmatprep.subr.bf16.mxu0 %v228
    %292 = vmatpush1.bf16.msra.mxu0 %v227
    %293 = vmatprep.subr.bf16.mxu0 %v230
    %294 = vmatpush1.bf16.msra.mxu0 %v229
    %295 = vmatprep.subr.bf16.mxu0 %v232
    %296 = vmatpush1.bf16.msra.mxu0 %v231
    %297 = vmatprep.subr.bf16.mxu0 %v234
    %298 = vmatpush1.bf16.msra.mxu0 %v233
    %299 = vmatprep.subr.bf16.mxu0 %v236
    %300 = vmatpush1.bf16.msra.mxu0 %v235
    %301 = vmatprep.subr.bf16.mxu0 %v238
    %302 = vmatpush1.bf16.msra.mxu0 %v237
    %303 = vmatprep.subr.bf16.mxu0 %v240
    %304 = vmatpush1.bf16.msra.mxu0 %v239
    %305 = vmatprep.subr.bf16.mxu0 %v242
    %306 = vmatpush1.bf16.msra.mxu0 %v241
    %307 = vmatprep.subr.bf16.mxu0 %v244
    %308 = vmatpush1.bf16.msra.mxu0 %v243
    %309 = vmatprep.subr.bf16.mxu0 %v246
    %310 = vmatpush1.bf16.msra.mxu0 %v245
    %311 = vmatprep.subr.bf16.mxu0 %v248
    %312 = vmatpush1.bf16.msra.mxu0 %v247
    %313 = vmatprep.subr.bf16.mxu0 %v250
    %314 = vmatpush1.bf16.msra.mxu0 %v249
    %315 = vmatprep.subr.bf16.mxu0 %v252
    %316 = vmatpush1.bf16.msra.mxu0 %v251
    %317 = vmatprep.subr.bf16.mxu0 %v254
    %318 = vmatpush1.bf16.msra.mxu0 %v253
    %319 = vmatprep.mubr.bf16.mxu0 %v80
    %320 = vmatmul.mubr.bf16.gmra.mrb[0].mxu0 %v79
    %v321 = vpop.f32.mrb[0].mxu0
    %v322 = vadd.f32 %v120, %v321
    %v323 = vpop.f32.mrb[0].mxu0
    %v324 = vadd.f32 %v124, %v323
    %v325 = vpop.f32.mrb[0].mxu0
    %v326 = vadd.f32 %v120, %v325
    %v327 = vpop.f32.mrb[0].mxu0
    %v328 = vadd.f32 %v124, %v327
    %329 = vmatprep.mubr.bf16.mxu0 %v82
    %330 = vmatmul.mubr.bf16.gmra.mrb[0].mxu0 %v81
    %v331 = vpop.f32.mrb[0].mxu0
    %v332 = vadd.f32 %v120, %v331
    %v333 = vpop.f32.mrb[0].mxu0
    %v334 = vadd.f32 %v124, %v333
    %v335 = vpop.f32.mrb[0].mxu0
    %v336 = vadd.f32 %v120, %v335
    %v337 = vpop.f32.mrb[0].mxu0
    %v338 = vadd.f32 %v124, %v337
    %339 = vdwg.mxu0
    %v340 = vmax.f32 %v322, 0.0
    %v341 = vmax.f32 %v324, 0.0
    %v342 = vmax.f32 %v326, 0.0
    %v343 = vmax.f32 %v328, 0.0
    %v344 = vmax.f32 %v332, 0.0
    %v345 = vmax.f32 %v334, 0.0
    %v346 = vmax.f32 %v336, 0.0
    %v347 = vmax.f32 %v338, 0.0
    %v348 = vld [vmem:[#allocation2] sm:$0xff]
    %v349 = vld [vmem:[#allocation2 + $0x8] sm:$0xff]
    %v350 = vld [vmem:[#allocation2 + $0x10] sm:$0xff]
    %v351 = vld [vmem:[#allocation2 + $0x18] sm:$0xff]
    %v352 = vpack.c.bf16 %v342, %v340
    %v353 = vpack.c.bf16 %v343, %v341
    %v354 = vpack.c.bf16 %v346, %v344
    %v355 = vpack.c.bf16 %v347, %v345
    %v356 = vld [vmem:[#allocation8] sm:$0xf]
    %v357 = vld [vmem:[#allocation8 + $0x4] sm:$0xf]
    %v358 = vld [vmem:[#allocation8 + $0x8] sm:$0xf]
    %v359 = vld [vmem:[#allocation8 + $0xc] sm:$0xf]
    %v360 = vld [vmem:[#allocation8 + $0x10] sm:$0xf]
    %v361 = vld [vmem:[#allocation8 + $0x14] sm:$0xf]
    %v362 = vld [vmem:[#allocation8 + $0x18] sm:$0xf]
    %v363 = vld [vmem:[#allocation8 + $0x1c] sm:$0xf]
    %v364 = vld [vmem:[#allocation8 + $0x20] sm:$0xf]
    %v365 = vld [vmem:[#allocation8 + $0x24] sm:$0xf]
    %v366 = vld [vmem:[#allocation8 + $0x28] sm:$0xf]
    %v367 = vld [vmem:[#allocation8 + $0x2c] sm:$0xf]
    %v368 = vld [vmem:[#allocation8 + $0x30] sm:$0xf]
    %v369 = vld [vmem:[#allocation8 + $0x34] sm:$0xf]
    %v370 = vld [vmem:[#allocation8 + $0x38] sm:$0xf]
    %v371 = vld [vmem:[#allocation8 + $0x3c] sm:$0xf]
    %v372 = vld [vmem:[#allocation8 + $0x40] sm:$0xf]
    %v373 = vld [vmem:[#allocation8 + $0x44] sm:$0xf]
    %v374 = vld [vmem:[#allocation8 + $0x48] sm:$0xf]
    %v375 = vld [vmem:[#allocation8 + $0x4c] sm:$0xf]
    %v376 = vld [vmem:[#allocation8 + $0x50] sm:$0xf]
    %v377 = vld [vmem:[#allocation8 + $0x54] sm:$0xf]
    %v378 = vld [vmem:[#allocation8 + $0x58] sm:$0xf]
    %v379 = vld [vmem:[#allocation8 + $0x5c] sm:$0xf]
    %v380 = vld [vmem:[#allocation8 + $0x60] sm:$0xf]
    %v381 = vld [vmem:[#allocation8 + $0x64] sm:$0xf]
    %v382 = vld [vmem:[#allocation8 + $0x68] sm:$0xf]
    %v383 = vld [vmem:[#allocation8 + $0x6c] sm:$0xf]
    %v384 = vld [vmem:[#allocation8 + $0x70] sm:$0xf]
    %v385 = vld [vmem:[#allocation8 + $0x74] sm:$0xf]
    %v386 = vld [vmem:[#allocation8 + $0x78] sm:$0xf]
    %v387 = vld [vmem:[#allocation8 + $0x7c] sm:$0xf]
    %v420 = vunpack.c.l.b16 %v356
    %v421 = vunpack.c.l.b16 %v357
    %v422 = vunpack.c.l.b16 %v358
    %v423 = vunpack.c.l.b16 %v359
    %v424 = vunpack.c.l.b16 %v360
    %v425 = vunpack.c.l.b16 %v361
    %v426 = vunpack.c.l.b16 %v362
    %v427 = vunpack.c.l.b16 %v363
    %v428 = vunpack.c.l.b16 %v364
    %v429 = vunpack.c.l.b16 %v365
    %v430 = vunpack.c.l.b16 %v366
    %v431 = vunpack.c.l.b16 %v367
    %v432 = vunpack.c.l.b16 %v368
    %v433 = vunpack.c.l.b16 %v369
    %v434 = vunpack.c.l.b16 %v370
    %v435 = vunpack.c.l.b16 %v371
    %v436 = vunpack.c.l.b16 %v372
    %v437 = vunpack.c.l.b16 %v373
    %v438 = vunpack.c.l.b16 %v374
    %v439 = vunpack.c.l.b16 %v375
    %v440 = vunpack.c.l.b16 %v376
    %v441 = vunpack.c.l.b16 %v377
    %v442 = vunpack.c.l.b16 %v378
    %v443 = vunpack.c.l.b16 %v379
    %v444 = vunpack.c.l.b16 %v380
    %v445 = vunpack.c.l.b16 %v381
    %v446 = vunpack.c.l.b16 %v382
    %v447 = vunpack.c.l.b16 %v383
    %v448 = vunpack.c.l.b16 %v384
    %v449 = vunpack.c.l.b16 %v385
    %v450 = vunpack.c.l.b16 %v386
    %v451 = vunpack.c.l.b16 %v387
    %v452 = vpack.c.b16 %v421, %v420
    %v453 = vpack.c.b16 %v423, %v422
    %v454 = vpack.c.b16 %v425, %v424
    %v455 = vpack.c.b16 %v427, %v426
    %v456 = vpack.c.b16 %v429, %v428
    %v457 = vpack.c.b16 %v431, %v430
    %v458 = vpack.c.b16 %v433, %v432
    %v459 = vpack.c.b16 %v435, %v434
    %v460 = vpack.c.b16 %v437, %v436
    %v461 = vpack.c.b16 %v439, %v438
    %v462 = vpack.c.b16 %v441, %v440
    %v463 = vpack.c.b16 %v443, %v442
    %v464 = vpack.c.b16 %v445, %v444
    %v465 = vpack.c.b16 %v447, %v446
    %v466 = vpack.c.b16 %v449, %v448
    %v467 = vpack.c.b16 %v451, %v450
    %484 = vmatprep.subr.bf16.mxu0 0
    %485 = vmatpush1.bf16.msra.mxu0 %v452
    %486 = vmatprep.subr.bf16.mxu0 0
    %487 = vmatpush1.bf16.msra.mxu0 %v453
    %488 = vmatprep.subr.bf16.mxu0 0
    %489 = vmatpush1.bf16.msra.mxu0 %v454
    %490 = vmatprep.subr.bf16.mxu0 0
    %491 = vmatpush1.bf16.msra.mxu0 %v455
    %492 = vmatprep.subr.bf16.mxu0 0
    %493 = vmatpush1.bf16.msra.mxu0 %v456
    %494 = vmatprep.subr.bf16.mxu0 0
    %495 = vmatpush1.bf16.msra.mxu0 %v457
    %496 = vmatprep.subr.bf16.mxu0 0
    %497 = vmatpush1.bf16.msra.mxu0 %v458
    %498 = vmatprep.subr.bf16.mxu0 0
    %499 = vmatpush1.bf16.msra.mxu0 %v459
    %500 = vmatprep.subr.bf16.mxu0 0
    %501 = vmatpush1.bf16.msra.mxu0 %v460
    %502 = vmatprep.subr.bf16.mxu0 0
    %503 = vmatpush1.bf16.msra.mxu0 %v461
    %504 = vmatprep.subr.bf16.mxu0 0
    %505 = vmatpush1.bf16.msra.mxu0 %v462
    %506 = vmatprep.subr.bf16.mxu0 0
    %507 = vmatpush1.bf16.msra.mxu0 %v463
    %508 = vmatprep.subr.bf16.mxu0 0
    %509 = vmatpush1.bf16.msra.mxu0 %v464
    %510 = vmatprep.subr.bf16.mxu0 0
    %511 = vmatpush1.bf16.msra.mxu0 %v465
    %512 = vmatprep.subr.bf16.mxu0 0
    %513 = vmatpush1.bf16.msra.mxu0 %v466
    %514 = vmatprep.subr.bf16.mxu0 0
    %515 = vmatpush1.bf16.msra.mxu0 %v467
    %516 = vmatprep.mubr.bf16.mxu0 %v353
    %517 = vmatmul.mubr.bf16.gmra.mrb[0].mxu0 %v352
    %v518 = vpop.f32.mrb[0].mxu0
    %v519 = vadd.f32 0.0, %v518
    %v520 = vpop.f32.mrb[0].mxu0
    %v521 = vpop.f32.mrb[0].mxu0
    %v522 = vadd.f32 0.0, %v521
    %v523 = vpop.f32.mrb[0].mxu0
    %524 = vmatprep.mubr.bf16.mxu0 %v355
    %525 = vmatmul.mubr.bf16.gmra.mrb[0].mxu0 %v354
    %v526 = vpop.f32.mrb[0].mxu0
    %v527 = vadd.f32 0.0, %v526
    %v528 = vpop.f32.mrb[0].mxu0
    %v529 = vpop.f32.mrb[0].mxu0
    %v530 = vadd.f32 0.0, %v529
    %v531 = vpop.f32.mrb[0].mxu0
    %532 = vdwg.mxu0
    %v533 = vadd.f32 %v348, %v519
    %v534 = vadd.f32 %v349, %v522
    %v535 = vadd.f32 %v350, %v527
    %v536 = vadd.f32 %v351, %v530
    %537 = vst [vmem:[#allocation2] sm:$0xff] %v533
    %538 = vst [vmem:[#allocation2 + $0x8] sm:$0xff] %v534
    %539 = vst [vmem:[#allocation2 + $0x10] sm:$0xff] %v535
    %540 = vst [vmem:[#allocation2 + $0x18] sm:$0xff] %v536
    // Predicated region
    $region38: #{_forward.1} parent=1 // pred_check
      %p541 = pneg %p63
    $region39: #{_forward.1} parent=1 // pred_check_branch
      %543 = sbr.rel (%p541) target = $region41
    $region40: #{_forward.1} parent=1 // pred_region
      %v544 = vld [vmem:[#allocation2] sm:$0xff]
      %v545 = vld [vmem:[#allocation2 + $0x8] sm:$0xff]
      %v546 = vld [vmem:[#allocation2 + $0x10] sm:$0xff]
      %v547 = vld [vmem:[#allocation2 + $0x18] sm:$0xff]
      %v548 = vld [vmem:[%s4] sm:$0x1]
      %v550 = vlaneseq
      %v551 = vshrl.u32 %v550, 7
      %v552 = vsub.s32 0, %v551
      %v553 = vrot.slane %v548, %v552
      %v555 = vadd.f32 %v544, %v553
      %v556 = vadd.f32 %v545, %v553
      %v557 = vadd.f32 %v546, %v553
      %v558 = vadd.f32 %v547, %v553
      %559 = vst [vmem:[#allocation9] sm:$0xff] %v555
      %560 = vst [vmem:[#allocation9 + $0x8] sm:$0xff] %v556
      %561 = vst [vmem:[#allocation9 + $0x10] sm:$0xff] %v557
      %562 = vst [vmem:[#allocation9 + $0x18] sm:$0xff] %v558
    $region41: #{_forward.1} parent=1 // pred_fallthru
      _
    // Predicated region
    $region42: #{_forward.1} parent=1 // pred_check
      _
    $region43: #{_forward.1} parent=1 // pred_check_branch
      %564 = sbr.rel (0) target = $region45
    $region44: #{_forward.1} parent=1 // pred_region
      %s566 = ssub.s32 512, 512
      %567 = vsyncadd [#allocation5], %s566
      %s568 = sshll.u32 [#allocation9], 4
      %s569 = int_to_ptr.vmem [resolvable:$true] %s568
      %574 = dma.vmem_to_hbm [thread:$0]  %s569, 512, %s5, [#allocation5], 128, 128, 8
    $region45: #{_forward.1} parent=1 // pred_fallthru
      _
    // Predicated region
    $region46: #{_forward.1} parent=1 // pred_check
      _
    $region47: #{_forward.1} parent=1 // pred_check_branch
      %576 = sbr.rel (0) target = $region49
    $region48: #{_forward.1} parent=1 // pred_region
      %577 = dma.done [#allocation5], 512
    $region49: #{_forward.1} parent=1 // pred_fallthru
      _
    %578 = vsyncpa [#allocation4], 1
    %579 = vsyncpa [#allocation7], 1
    %580 = vsyncpa [#allocation5], 1

// kernel: _forward.1
$region0: #{_forward.1}
  #allocation0 [shape = 'u32[]', space=smem, size = 0x4, offset = 0x4, fixed_abs, tag = 'smem constant byte address 0x4 - core index']
  #allocation1 [shape = 'u32[144,128]{1,0:T(1,128)}', space=vmem, size = 0x12000, scoped, tag = 'internal scratch']
  #allocation2 [shape = 'f32[32,128]{1,0:T(8,128)}', space=vmem, size = 0x4000, scoped, tag = 'scratch operand']
  %s0 = inlined_call_operand.hbm [shape: f32[32,256], index: 0, kind: input, shape index: {}]
  %s1 = inlined_call_operand.hbm [shape: bf16[256,256], index: 1, kind: input, shape index: {}]
  %s2 = inlined_call_operand.vmem [shape: f32[1,256], index: 2, kind: input, shape index: {}]
  %s3 = inlined_call_operand.hbm [shape: bf16[256,128], index: 3, kind: input, shape index: {}]
  %s4 = inlined_call_operand.vmem [shape: f32[1,128], index: 4, kind: input, shape index: {}]
  %s5 = inlined_call_operand.hbm [shape: f32[32,128], index: 5, kind: output, shape index: {}]
  %s6 = sld [smem:[#allocation0]]
  $region50: #{_forward.1} parent=0
    _
  %s8 = ssub.s32 1, %s6
  %s9 = scalar_select 0, %s8, %s6
  $region1: #{_forward.1} parent=0
    #allocation3 [shape = 'u8[32768]{0}', space=vmem, size = 0x8000, scoped, tag = 'input window, operand 0, single buffered']
    #allocation4 [shape = 's32[1]{0}', space=sflag, size = 0x4, scoped, tag = 'scoped memory for _forward.1']
    #allocation5 [shape = 's32[1]{0}', space=sflag, size = 0x4, scoped, tag = 'scoped memory for _forward.1']
    #allocation6 [shape = 'u8[131072]{0}', space=vmem, size = 0x20000, scoped, tag = 'input window, operand 1, single buffered']
    #allocation7 [shape = 's32[1]{0}', space=sflag, size = 0x4, scoped, tag = 'scoped memory for _forward.1']
    #allocation8 [shape = 'u8[65536]{0}', space=vmem, size = 0x10000, scoped, tag = 'input window, operand 3, single buffered']
    #allocation9 [shape = 'u8[16384]{0}', space=vmem, size = 0x4000, scoped, tag = 'output window, operand 0, single buffered']
    %10 = vsyncpa [#allocation4], 0
    %11 = vsyncpa [#allocation7], 0
    %12 = vsyncpa [#allocation5], 0
    // Predicated region
    $region2: #{_forward.1} parent=1 // pred_check
      _
    $region3: #{_forward.1} parent=1 // pred_check_branch
      %14 = sbr.rel (0) target = $region5
    $region4: #{_forward.1} parent=1 // pred_region
      %s16 = ssub.s32 1024, 1024
      %17 = vsyncadd [#allocation4], %s16
      %s18 = sshll.u32 [#allocation3], 4
      %s19 = int_to_ptr.vmem [resolvable:$true] %s18
      %24 = dma.hbm_to_vmem [thread:$0]  %s0, 1024, %s19, [#allocation4], 256, 256, 16
    $region5: #{_forward.1} parent=1 // pred_fallthru
      _
    // Predicated region
    $region6: #{_forward.1} parent=1 // pred_check
      _
    $region7: #{_forward.1} parent=1 // pred_check_branch
      %26 = sbr.rel (0) target = $region9
    $region8: #{_forward.1} parent=1 // pred_region
      %s28 = ssub.s32 4096, 4096
      %29 = vsyncadd [#allocation7], %s28
      %s30 = sshll.u32 [#allocation6], 4
      %s31 = int_to_ptr.vmem [resolvable:$true] %s30
      %36 = dma.hbm_to_vmem [thread:$0]  %s1, 4096, %s31, [#allocation7], 128, 128, 8
    $region9: #{_forward.1} parent=1 // pred_fallthru
      _
    // Predicated region
    $region10: #{_forward.1} parent=1 // pred_check
      _
    $region11: #{_forward.1} parent=1 // pred_check_branch
      %38 = sbr.rel (0) target = $region13
    $region12: #{_forward.1} parent=1 // pred_region
      _
    $region13: #{_forward.1} parent=1 // pred_fallthru
      _
    // Predicated region
    $region14: #{_forward.1} parent=1 // pred_check
      _
    $region15: #{_forward.1} parent=1 // pred_check_branch
      %40 = sbr.rel (0) target = $region17
    $region16: #{_forward.1} parent=1 // pred_region
      %s42 = ssub.s32 2048, 2048
      %43 = vsyncadd [#allocation7], %s42
      %s44 = sshll.u32 [#allocation8], 4
      %s45 = int_to_ptr.vmem [resolvable:$true] %s44
      %50 = dma.hbm_to_vmem [thread:$0]  %s3, 2048, %s45, [#allocation7], 64, 64, 4
    $region17: #{_forward.1} parent=1 // pred_fallthru
      _
    // Predicated region
    $region18: #{_forward.1} parent=1 // pred_check
      _
    $region19: #{_forward.1} parent=1 // pred_check_branch
      %52 = sbr.rel (0) target = $region21
    $region20: #{_forward.1} parent=1 // pred_region
      _
    $region21: #{_forward.1} parent=1 // pred_fallthru
      _
    // Predicated region
    $region22: #{_forward.1} parent=1 // pred_check
      _
    $region23: #{_forward.1} parent=1 // pred_check_branch
      %54 = sbr.rel (0) target = $region25
    $region24: #{_forward.1} parent=1 // pred_region
      %55 = dma.done [#allocation4], 1024
    $region25: #{_forward.1} parent=1 // pred_fallthru
      _
    // Predicated region
    $region26: #{_forward.1} parent=1 // pred_check
      _
    $region27: #{_forward.1} parent=1 // pred_check_branch
      %57 = sbr.rel (0) target = $region29
    $region28: #{_forward.1} parent=1 // pred_region
      %58 = dma.done [#allocation7], 4096
    $region29: #{_forward.1} parent=1 // pred_fallthru
      _
    // Predicated region
    $region30: #{_forward.1} parent=1 // pred_check
      _
    $region31: #{_forward.1} parent=1 // pred_check_branch
      %60 = sbr.rel (0) target = $region33
    $region32: #{_forward.1} parent=1 // pred_region
      %61 = dma.done [#allocation7], 2048
    $region33: #{_forward.1} parent=1 // pred_fallthru
      _
    %p63 = scmp.eq.s32.totalorder 0, 0
    // Predicated region
    $region34: #{_forward.1} parent=1 // pred_check
      %p64 = pneg %p63
    $region35: #{_forward.1} parent=1 // pred_check_branch
      %66 = sbr.rel (%p64) target = $region37
    $region36: #{_forward.1} parent=1 // pred_region
      %67 = vst [vmem:[#allocation2] sm:$0xff] 0.0
      %68 = vst [vmem:[#allocation2 + $0x8] sm:$0xff] 0.0
      %69 = vst [vmem:[#allocation2 + $0x10] sm:$0xff] 0.0
      %70 = vst [vmem:[#allocation2 + $0x18] sm:$0xff] 0.0
    $region37: #{_forward.1} parent=1 // pred_fallthru
      _
    %v71 = vld [vmem:[#allocation3] sm:$0xff]
    %v72 = vld [vmem:[#allocation3 + $0x8] sm:$0xff]
    %v73 = vld [vmem:[#allocation3 + $0x10] sm:$0xff]
    %v74 = vld [vmem:[#allocation3 + $0x18] sm:$0xff]
    %v75 = vld [vmem:[#allocation3 + $0x20] sm:$0xff]
    %v76 = vld [vmem:[#allocation3 + $0x28] sm:$0xff]
    %v77 = vld [vmem:[#allocation3 + $0x30] sm:$0xff]
    %v78 = vld [vmem:[#allocation3 + $0x38] sm:$0xff]
    %v79 = vpack.c.bf16 %v73, %v71
    %v80 = vpack.c.bf16 %v74, %v72
    %v81 = vpack.c.bf16 %v77, %v75
    %v82 = vpack.c.bf16 %v78, %v76
    %v83 = vld [vmem:[#allocation6] sm:$0xff]
    %v84 = vld [vmem:[#allocation6 + $0x8] sm:$0xff]
    %v85 = vld [vmem:[#allocation6 + $0x10] sm:$0xff]
    %v86 = vld [vmem:[#allocation6 + $0x18] sm:$0xff]
    %v87 = vld [vmem:[#allocation6 + $0x20] sm:$0xff]
    %v88 = vld [vmem:[#allocation6 + $0x28] sm:$0xff]
    %v89 = vld [vmem:[#allocation6 + $0x30] sm:$0xff]
    %v90 = vld [vmem:[#allocation6 + $0x38] sm:$0xff]
    %v91 = vld [vmem:[#allocation6 + $0x40] sm:$0xff]
    %v92 = vld [vmem:[#allocation6 + $0x48] sm:$0xff]
    %v93 = vld [vmem:[#allocation6 + $0x50] sm:$0xff]
    %v94 = vld [vmem:[#allocation6 + $0x58] sm:$0xff]
    %v95 = vld [vmem:[#allocation6 + $0x60] sm:$0xff]
    %v96 = vld [vmem:[#allocation6 + $0x68] sm:$0xff]
    %v97 = vld [vmem:[#allocation6 + $0x70] sm:$0xff]
    %v98 = vld [vmem:[#allocation6 + $0x78] sm:$0xff]
    %v99 = vld [vmem:[#allocation6 + $0x80] sm:$0xff]
    %v100 = vld [vmem:[#allocation6 + $0x88] sm:$0xff]
    %v101 = vld [vmem:[#allocation6 + $0x90] sm:$0xff]
    %v102 = vld [vmem:[#allocation6 + $0x98] sm:$0xff]
    %v103 = vld [vmem:[#allocation6 + $0xa0] sm:$0xff]
    %v104 = vld [vmem:[#allocation6 + $0xa8] sm:$0xff]
    %v105 = vld [vmem:[#allocation6 + $0xb0] sm:$0xff]
    %v106 = vld [vmem:[#allocation6 + $0xb8] sm:$0xff]
    %v107 = vld [vmem:[#allocation6 + $0xc0] sm:$0xff]
    %v108 = vld [vmem:[#allocation6 + $0xc8] sm:$0xff]
    %v109 = vld [vmem:[#allocation6 + $0xd0] sm:$0xff]
    %v110 = vld [vmem:[#allocation6 + $0xd8] sm:$0xff]
    %v111 = vld [vmem:[#allocation6 + $0xe0] sm:$0xff]
    %v112 = vld [vmem:[#allocation6 + $0xe8] sm:$0xff]
    %v113 = vld [vmem:[#allocation6 + $0xf0] sm:$0xff]
    %v114 = vld [vmem:[#allocation6 + $0xf8] sm:$0xff]
    %v115 = vld [vmem:[%s2] sm:$0x3]
    %v117 = vlaneseq
    %v118 = vshrl.u32 %v117, 7
    %v119 = vsub.s32 0, %v118
    %v120 = vrot.slane %v115, %v119
    %v121 = vlaneseq
    %v122 = vshrl.u32 %v121, 7
    %v123 = vsub.s32 1, %v122
    %v124 = vrot.slane %v115, %v123
    %v159 = vunpack.c.l.b16 %v83
    %v160 = vunpack.c.h.b16 %v83
    %v161 = vunpack.c.l.b16 %v84
    %v162 = vunpack.c.h.b16 %v84
    %v163 = vunpack.c.l.b16 %v85
    %v164 = vunpack.c.h.b16 %v85
    %v165 = vunpack.c.l.b16 %v86
    %v166 = vunpack.c.h.b16 %v86
    %v167 = vunpack.c.l.b16 %v87
    %v168 = vunpack.c.h.b16 %v87
    %v169 = vunpack.c.l.b16 %v88
    %v170 = vunpack.c.h.b16 %v88
    %v171 = vunpack.c.l.b16 %v89
    %v172 = vunpack.c.h.b16 %v89
    %v173 = vunpack.c.l.b16 %v90
    %v174 = vunpack.c.h.b16 %v90
    %v175 = vunpack.c.l.b16 %v91
    %v176 = vunpack.c.h.b16 %v91
    %v177 = vunpack.c.l.b16 %v92
    %v178 = vunpack.c.h.b16 %v92
    %v179 = vunpack.c.l.b16 %v93
    %v180 = vunpack.c.h.b16 %v93
    %v181 = vunpack.c.l.b16 %v94
    %v182 = vunpack.c.h.b16 %v94
    %v183 = vunpack.c.l.b16 %v95
    %v184 = vunpack.c.h.b16 %v95
    %v185 = vunpack.c.l.b16 %v96
    %v186 = vunpack.c.h.b16 %v96
    %v187 = vunpack.c.l.b16 %v97
    %v188 = vunpack.c.h.b16 %v97
    %v189 = vunpack.c.l.b16 %v98
    %v190 = vunpack.c.h.b16 %v98
    %v191 = vunpack.c.l.b16 %v99
    %v192 = vunpack.c.h.b16 %v99
    %v193 = vunpack.c.l.b16 %v100
    %v194 = vunpack.c.h.b16 %v100
    %v195 = vunpack.c.l.b16 %v101
    %v196 = vunpack.c.h.b16 %v101
    %v197 = vunpack.c.l.b16 %v102
    %v198 = vunpack.c.h.b16 %v102
    %v199 = vunpack.c.l.b16 %v103
    %v200 = vunpack.c.h.b16 %v103
    %v201 = vunpack.c.l.b16 %v104
    %v202 = vunpack.c.h.b16 %v104
    %v203 = vunpack.c.l.b16 %v105
    %v204 = vunpack.c.h.b16 %v105
    %v205 = vunpack.c.l.b16 %v106
    %v206 = vunpack.c.h.b16 %v106
    %v207 = vunpack.c.l.b16 %v107
    %v208 = vunpack.c.h.b16 %v107
    %v209 = vunpack.c.l.b16 %v108
    %v210 = vunpack.c.h.b16 %v108
    %v211 = vunpack.c.l.b16 %v109
    %v212 = vunpack.c.h.b16 %v109
    %v213 = vunpack.c.l.b16 %v110
    %v214 = vunpack.c.h.b16 %v110
    %v215 = vunpack.c.l.b16 %v111
    %v216 = vunpack.c.h.b16 %v111
    %v217 = vunpack.c.l.b16 %v112
    %v218 = vunpack.c.h.b16 %v112
    %v219 = vunpack.c.l.b16 %v113
    %v220 = vunpack.c.h.b16 %v113
    %v221 = vunpack.c.l.b16 %v114
    %v222 = vunpack.c.h.b16 %v114
    %v223 = vpack.c.b16 %v161, %v159
    %v224 = vpack.c.b16 %v162, %v160
    %v225 = vpack.c.b16 %v165, %v163
    %v226 = vpack.c.b16 %v166, %v164
    %v227 = vpack.c.b16 %v169, %v167
    %v228 = vpack.c.b16 %v170, %v168
    %v229 = vpack.c.b16 %v173, %v171
    %v230 = vpack.c.b16 %v174, %v172
    %v231 = vpack.c.b16 %v177, %v175
    %v232 = vpack.c.b16 %v178, %v176
    %v233 = vpack.c.b16 %v181, %v179
    %v234 = vpack.c.b16 %v182, %v180
    %v235 = vpack.c.b16 %v185, %v183
    %v236 = vpack.c.b16 %v186, %v184
    %v237 = vpack.c.b16 %v189, %v187
    %v238 = vpack.c.b16 %v190, %v188
    %v239 = vpack.c.b16 %v193, %v191
    %v240 = vpack.c.b16 %v194, %v192
    %v241 = vpack.c.b16 %v197, %v195
    %v242 = vpack.c.b16 %v198, %v196
    %v243 = vpack.c.b16 %v201, %v199
    %v244 = vpack.c.b16 %v202, %v200
    %v245 = vpack.c.b16 %v205, %v203
    %v246 = vpack.c.b16 %v206, %v204
    %v247 = vpack.c.b16 %v209, %v207
    %v248 = vpack.c.b16 %v210, %v208
    %v249 = vpack.c.b16 %v213, %v211
    %v250 = vpack.c.b16 %v214, %v212
    %v251 = vpack.c.b16 %v217, %v215
    %v252 = vpack.c.b16 %v218, %v216
    %v253 = vpack.c.b16 %v221, %v219
    %v254 = vpack.c.b16 %v222, %v220
    %287 = vmatprep.subr.bf16.mxu0 %v224
    %288 = vmatpush1.bf16.msra.mxu0 %v223
    %289 = vmatprep.subr.bf16.mxu0 %v226
    %290 = vmatpush1.bf16.msra.mxu0 %v225
    %291 = vmatprep.subr.bf16.mxu0 %v228
    %292 = vmatpush1.bf16.msra.mxu0 %v227
    %293 = vmatprep.subr.bf16.mxu0 %v230
    %294 = vmatpush1.bf16.msra.mxu0 %v229
    %295 = vmatprep.subr.bf16.mxu0 %v232
    %296 = vmatpush1.bf16.msra.mxu0 %v231
    %297 = vmatprep.subr.bf16.mxu0 %v234
    %298 = vmatpush1.bf16.msra.mxu0 %v233
    %299 = vmatprep.subr.bf16.mxu0 %v236
    %300 = vmatpush1.bf16.msra.mxu0 %v235
    %301 = vmatprep.subr.bf16.mxu0 %v238
    %302 = vmatpush1.bf16.msra.mxu0 %v237
    %303 = vmatprep.subr.bf16.mxu0 %v240
    %304 = vmatpush1.bf16.msra.mxu0 %v239
    %305 = vmatprep.subr.bf16.mxu0 %v242
    %306 = vmatpush1.bf16.msra.mxu0 %v241
    %307 = vmatprep.subr.bf16.mxu0 %v244
    %308 = vmatpush1.bf16.msra.mxu0 %v243
    %309 = vmatprep.subr.bf16.mxu0 %v246
    %310 = vmatpush1.bf16.msra.mxu0 %v245
    %311 = vmatprep.subr.bf16.mxu0 %v248
    %312 = vmatpush1.bf16.msra.mxu0 %v247
    %313 = vmatprep.subr.bf16.mxu0 %v250
    %314 = vmatpush1.bf16.msra.mxu0 %v249
    %315 = vmatprep.subr.bf16.mxu0 %v252
    %316 = vmatpush1.bf16.msra.mxu0 %v251
    %317 = vmatprep.subr.bf16.mxu0 %v254
    %318 = vmatpush1.bf16.msra.mxu0 %v253
    %319 = vmatprep.mubr.bf16.mxu0 %v80
    %320 = vmatmul.mubr.bf16.gmra.mrb[0].mxu0 %v79
    %v321 = vpop.f32.mrb[0].mxu0
    %v322 = vadd.f32 %v120, %v321
    %v323 = vpop.f32.mrb[0].mxu0
    %v324 = vadd.f32 %v124, %v323
    %v325 = vpop.f32.mrb[0].mxu0
    %v326 = vadd.f32 %v120, %v325
    %v327 = vpop.f32.mrb[0].mxu0
    %v328 = vadd.f32 %v124, %v327
    %329 = vmatprep.mubr.bf16.mxu0 %v82
    %330 = vmatmul.mubr.bf16.gmra.mrb[0].mxu0 %v81
    %v331 = vpop.f32.mrb[0].mxu0
    %v332 = vadd.f32 %v120, %v331
    %v333 = vpop.f32.mrb[0].mxu0
    %v334 = vadd.f32 %v124, %v333
    %v335 = vpop.f32.mrb[0].mxu0
    %v336 = vadd.f32 %v120, %v335
    %v337 = vpop.f32.mrb[0].mxu0
    %v338 = vadd.f32 %v124, %v337
    %339 = vdwg.mxu0
    %v340 = vmax.f32 %v322, 0.0
    %v341 = vmax.f32 %v324, 0.0
    %v342 = vmax.f32 %v326, 0.0
    %v343 = vmax.f32 %v328, 0.0
    %v344 = vmax.f32 %v332, 0.0
    %v345 = vmax.f32 %v334, 0.0
    %v346 = vmax.f32 %v336, 0.0
    %v347 = vmax.f32 %v338, 0.0
    %v348 = vld [vmem:[#allocation2] sm:$0xff]
    %v349 = vld [vmem:[#allocation2 + $0x8] sm:$0xff]
    %v350 = vld [vmem:[#allocation2 + $0x10] sm:$0xff]
    %v351 = vld [vmem:[#allocation2 + $0x18] sm:$0xff]
    %v352 = vpack.c.bf16 %v342, %v340
    %v353 = vpack.c.bf16 %v343, %v341
    %v354 = vpack.c.bf16 %v346, %v344
    %v355 = vpack.c.bf16 %v347, %v345
    %v356 = vld [vmem:[#allocation8] sm:$0xf]
    %v357 = vld [vmem:[#allocation8 + $0x4] sm:$0xf]
    %v358 = vld [vmem:[#allocation8 + $0x8] sm:$0xf]
    %v359 = vld [vmem:[#allocation8 + $0xc] sm:$0xf]
    %v360 = vld [vmem:[#allocation8 + $0x10] sm:$0xf]
    %v361 = vld [vmem:[#allocation8 + $0x14] sm:$0xf]
    %v362 = vld [vmem:[#allocation8 + $0x18] sm:$0xf]
    %v363 = vld [vmem:[#allocation8 + $0x1c] sm:$0xf]
    %v364 = vld [vmem:[#allocation8 + $0x20] sm:$0xf]
    %v365 = vld [vmem:[#allocation8 + $0x24] sm:$0xf]
    %v366 = vld [vmem:[#allocation8 + $0x28] sm:$0xf]
    %v367 = vld [vmem:[#allocation8 + $0x2c] sm:$0xf]
    %v368 = vld [vmem:[#allocation8 + $0x30] sm:$0xf]
    %v369 = vld [vmem:[#allocation8 + $0x34] sm:$0xf]
    %v370 = vld [vmem:[#allocation8 + $0x38] sm:$0xf]
    %v371 = vld [vmem:[#allocation8 + $0x3c] sm:$0xf]
    %v372 = vld [vmem:[#allocation8 + $0x40] sm:$0xf]
    %v373 = vld [vmem:[#allocation8 + $0x44] sm:$0xf]
    %v374 = vld [vmem:[#allocation8 + $0x48] sm:$0xf]
    %v375 = vld [vmem:[#allocation8 + $0x4c] sm:$0xf]
    %v376 = vld [vmem:[#allocation8 + $0x50] sm:$0xf]
    %v377 = vld [vmem:[#allocation8 + $0x54] sm:$0xf]
    %v378 = vld [vmem:[#allocation8 + $0x58] sm:$0xf]
    %v379 = vld [vmem:[#allocation8 + $0x5c] sm:$0xf]
    %v380 = vld [vmem:[#allocation8 + $0x60] sm:$0xf]
    %v381 = vld [vmem:[#allocation8 + $0x64] sm:$0xf]
    %v382 = vld [vmem:[#allocation8 + $0x68] sm:$0xf]
    %v383 = vld [vmem:[#allocation8 + $0x6c] sm:$0xf]
    %v384 = vld [vmem:[#allocation8 + $0x70] sm:$0xf]
    %v385 = vld [vmem:[#allocation8 + $0x74] sm:$0xf]
    %v386 = vld [vmem:[#allocation8 + $0x78] sm:$0xf]
    %v387 = vld [vmem:[#allocation8 + $0x7c] sm:$0xf]
    %v420 = vunpack.c.l.b16 %v356
    %v421 = vunpack.c.l.b16 %v357
    %v422 = vunpack.c.l.b16 %v358
    %v423 = vunpack.c.l.b16 %v359
    %v424 = vunpack.c.l.b16 %v360
    %v425 = vunpack.c.l.b16 %v361
    %v426 = vunpack.c.l.b16 %v362
    %v427 = vunpack.c.l.b16 %v363
    %v428 = vunpack.c.l.b16 %v364
    %v429 = vunpack.c.l.b16 %v365
    %v430 = vunpack.c.l.b16 %v366
    %v431 = vunpack.c.l.b16 %v367
    %v432 = vunpack.c.l.b16 %v368
    %v433 = vunpack.c.l.b16 %v369
    %v434 = vunpack.c.l.b16 %v370
    %v435 = vunpack.c.l.b16 %v371
    %v436 = vunpack.c.l.b16 %v372
    %v437 = vunpack.c.l.b16 %v373
    %v438 = vunpack.c.l.b16 %v374
    %v439 = vunpack.c.l.b16 %v375
    %v440 = vunpack.c.l.b16 %v376
    %v441 = vunpack.c.l.b16 %v377
    %v442 = vunpack.c.l.b16 %v378
    %v443 = vunpack.c.l.b16 %v379
    %v444 = vunpack.c.l.b16 %v380
    %v445 = vunpack.c.l.b16 %v381
    %v446 = vunpack.c.l.b16 %v382
    %v447 = vunpack.c.l.b16 %v383
    %v448 = vunpack.c.l.b16 %v384
    %v449 = vunpack.c.l.b16 %v385
    %v450 = vunpack.c.l.b16 %v386
    %v451 = vunpack.c.l.b16 %v387
    %v452 = vpack.c.b16 %v421, %v420
    %v453 = vpack.c.b16 %v423, %v422
    %v454 = vpack.c.b16 %v425, %v424
    %v455 = vpack.c.b16 %v427, %v426
    %v456 = vpack.c.b16 %v429, %v428
    %v457 = vpack.c.b16 %v431, %v430
    %v458 = vpack.c.b16 %v433, %v432
    %v459 = vpack.c.b16 %v435, %v434
    %v460 = vpack.c.b16 %v437, %v436
    %v461 = vpack.c.b16 %v439, %v438
    %v462 = vpack.c.b16 %v441, %v440
    %v463 = vpack.c.b16 %v443, %v442
    %v464 = vpack.c.b16 %v445, %v444
    %v465 = vpack.c.b16 %v447, %v446
    %v466 = vpack.c.b16 %v449, %v448
    %v467 = vpack.c.b16 %v451, %v450
    %484 = vmatprep.subr.bf16.mxu0 0
    %485 = vmatpush1.bf16.msra.mxu0 %v452
    %486 = vmatprep.subr.bf16.mxu0 0
    %487 = vmatpush1.bf16.msra.mxu0 %v453
    %488 = vmatprep.subr.bf16.mxu0 0
    %489 = vmatpush1.bf16.msra.mxu0 %v454
    %490 = vmatprep.subr.bf16.mxu0 0
    %491 = vmatpush1.bf16.msra.mxu0 %v455
    %492 = vmatprep.subr.bf16.mxu0 0
    %493 = vmatpush1.bf16.msra.mxu0 %v456
    %494 = vmatprep.subr.bf16.mxu0 0
    %495 = vmatpush1.bf16.msra.mxu0 %v457
    %496 = vmatprep.subr.bf16.mxu0 0
    %497 = vmatpush1.bf16.msra.mxu0 %v458
    %498 = vmatprep.subr.bf16.mxu0 0
    %499 = vmatpush1.bf16.msra.mxu0 %v459
    %500 = vmatprep.subr.bf16.mxu0 0
    %501 = vmatpush1.bf16.msra.mxu0 %v460
    %502 = vmatprep.subr.bf16.mxu0 0
    %503 = vmatpush1.bf16.msra.mxu0 %v461
    %504 = vmatprep.subr.bf16.mxu0 0
    %505 = vmatpush1.bf16.msra.mxu0 %v462
    %506 = vmatprep.subr.bf16.mxu0 0
    %507 = vmatpush1.bf16.msra.mxu0 %v463
    %508 = vmatprep.subr.bf16.mxu0 0
    %509 = vmatpush1.bf16.msra.mxu0 %v464
    %510 = vmatprep.subr.bf16.mxu0 0
    %511 = vmatpush1.bf16.msra.mxu0 %v465
    %512 = vmatprep.subr.bf16.mxu0 0
    %513 = vmatpush1.bf16.msra.mxu0 %v466
    %514 = vmatprep.subr.bf16.mxu0 0
    %515 = vmatpush1.bf16.msra.mxu0 %v467
    %516 = vmatprep.mubr.bf16.mxu0 %v353
    %517 = vmatmul.mubr.bf16.gmra.mrb[0].mxu0 %v352
    %v518 = vpop.f32.mrb[0].mxu0
    %v519 = vadd.f32 0.0, %v518
    %v520 = vpop.f32.mrb[0].mxu0
    %v521 = vpop.f32.mrb[0].mxu0
    %v522 = vadd.f32 0.0, %v521
    %v523 = vpop.f32.mrb[0].mxu0
    %524 = vmatprep.mubr.bf16.mxu0 %v355
    %525 = vmatmul.mubr.bf16.gmra.mrb[0].mxu0 %v354
    %v526 = vpop.f32.mrb[0].mxu0
    %v527 = vadd.f32 0.0, %v526
    %v528 = vpop.f32.mrb[0].mxu0
    %v529 = vpop.f32.mrb[0].mxu0
    %v530 = vadd.f32 0.0, %v529
    %v531 = vpop.f32.mrb[0].mxu0
    %532 = vdwg.mxu0
    %v533 = vadd.f32 %v348, %v519
    %v534 = vadd.f32 %v349, %v522
    %v535 = vadd.f32 %v350, %v527
    %v536 = vadd.f32 %v351, %v530
    %537 = vst [vmem:[#allocation2] sm:$0xff] %v533
    %538 = vst [vmem:[#allocation2 + $0x8] sm:$0xff] %v534
    %539 = vst [vmem:[#allocation2 + $0x10] sm:$0xff] %v535
    %540 = vst [vmem:[#allocation2 + $0x18] sm:$0xff] %v536
    // Predicated region
    $region38: #{_forward.1} parent=1 // pred_check
      %p541 = pneg %p63
    $region39: #{_forward.1} parent=1 // pred_check_branch
      %543 = sbr.rel (%p541) target = $region41
    $region40: #{_forward.1} parent=1 // pred_region
      %v544 = vld [vmem:[#allocation2] sm:$0xff]
      %v545 = vld [vmem:[#allocation2 + $0x8] sm:$0xff]
      %v546 = vld [vmem:[#allocation2 + $0x10] sm:$0xff]
      %v547 = vld [vmem:[#allocation2 + $0x18] sm:$0xff]
      %v548 = vld [vmem:[%s4] sm:$0x1]
      %v550 = vlaneseq
      %v551 = vshrl.u32 %v550, 7
      %v552 = vsub.s32 0, %v551
      %v553 = vrot.slane %v548, %v552
      %v555 = vadd.f32 %v544, %v553
      %v556 = vadd.f32 %v545, %v553
      %v557 = vadd.f32 %v546, %v553
      %v558 = vadd.f32 %v547, %v553
      %559 = vst [vmem:[#allocation9] sm:$0xff] %v555
      %560 = vst [vmem:[#allocation9 + $0x8] sm:$0xff] %v556
      %561 = vst [vmem:[#allocation9 + $0x10] sm:$0xff] %v557
      %562 = vst [vmem:[#allocation9 + $0x18] sm:$0xff] %v558
    $region41: #{_forward.1} parent=1 // pred_fallthru
      _
    // Predicated region
    $region42: #{_forward.1} parent=1 // pred_check
      _
    $region43: #{_forward.1} parent=1 // pred_check_branch
      %564 = sbr.rel (0) target = $region45
    $region44: #{_forward.1} parent=1 // pred_region
      %s566 = ssub.s32 512, 512
      %567 = vsyncadd [#allocation5], %s566
      %s568 = sshll.u32 [#allocation9], 4
      %s569 = int_to_ptr.vmem [resolvable:$true] %s568
      %574 = dma.vmem_to_hbm [thread:$0]  %s569, 512, %s5, [#allocation5], 128, 128, 8
    $region45: #{_forward.1} parent=1 // pred_fallthru
      _
    // Predicated region
    $region46: #{_forward.1} parent=1 // pred_check
      _
    $region47: #{_forward.1} parent=1 // pred_check_branch
      %576 = sbr.rel (0) target = $region49
    $region48: #{_forward.1} parent=1 // pred_region
      %577 = dma.done [#allocation5], 512
    $region49: #{_forward.1} parent=1 // pred_fallthru
      _
    %578 = vsyncpa [#allocation4], 1
    %579 = vsyncpa [#allocation7], 1
    %580 = vsyncpa [#allocation5], 1

</llo_original>
